<compile_context>
chip_gen: v6e
topology: v6e:2x2x1
jax: 0.10.0
libtpu: 0.0.40
codegen_flags: <defaults>
</compile_context>

<pallas_src>
import functools

import jax
import jax.numpy as jnp
from jax.experimental import pallas as pl
from jax.experimental.pallas import tpu as pltpu


_LANE = 128
_SUBLANE = 8


def _round_up(x: int, m: int) -> int:
    return ((x + m - 1) // m) * m


def _default_carry_dtype():
    """bf16 inter-layer activations on v6e/v7x; f32 on v5e and older (no bf16 VPU/EUP)."""
    try:
        kind = jax.devices()[0].device_kind.lower()
    except Exception:
        return jnp.float32
    if any(tag in kind for tag in ("v2", "v3", "v4", "v5")):
        return jnp.float32
    return jnp.bfloat16


# ---------------------------------------------------------------------------
# Parameter preparation — run ONCE, outside the per-step forward path.
# ---------------------------------------------------------------------------
def prepare_params(weights, biases, *, stream=None,
                   stream_threshold_bytes=20 * 1024 * 1024):
    """Zero-pad weights to 128-aligned bf16 tiles and pack all biases into one
    f32 operand.  The returned dict's *structure* encodes the kernel mode:
      {'w': (...), 'b': ...}                              -> VMEM-resident weights
      {'w_first', 'w_hidden', 'w_last', 'b'}              -> streamed hidden weights
    """
    n_linear = len(weights)
    assert n_linear == len(biases) and n_linear >= 2
    num_hidden = n_linear - 2

    in_p = [_round_up(w.shape[0], _LANE) for w in weights]
    out_p = [_round_up(w.shape[1], _LANE) for w in weights]
    max_out_p = max(out_p)

    def pad_w(w, ip, op):
        wp = jnp.zeros((ip, op), dtype=jnp.bfloat16)
        return wp.at[: w.shape[0], : w.shape[1]].set(w.astype(jnp.bfloat16))

    w_padded = [pad_w(w, ip, op) for w, ip, op in zip(weights, in_p, out_p)]

    b_packed = jnp.zeros((n_linear, max_out_p), dtype=jnp.float32)
    for i, b in enumerate(biases):
        b_packed = b_packed.at[i, : b.shape[0]].set(b.astype(jnp.float32))

    total_w_bytes = sum(int(w.size) * 2 for w in w_padded)
    if stream is None:
        stream = total_w_bytes > stream_threshold_bytes
    stream = bool(stream) and num_hidden >= 1

    if stream:
        return {
            "w_first": w_padded[0],
            "w_hidden": jnp.stack(w_padded[1:-1]),  # (num_hidden, width_p, width_p)
            "w_last": w_padded[-1],
            "b": b_packed,
        }
    return {"w": tuple(w_padded), "b": b_packed}


# ---------------------------------------------------------------------------
# Kernels
# ---------------------------------------------------------------------------
def _make_resident_kernel(num_hidden, out_p, carry_dtype):
    """All weights VMEM-resident.  refs = (x, w_0..w_{n-1}, b_packed, out)."""
    n_linear = num_hidden + 2

    def kernel(x_ref, *refs):
        o_ref = refs[-1]
        b_ref = refs[-2]
        w_refs = refs[:-2]
        h = x_ref[...]
        for i in range(n_linear):
            op = out_p[i]
            b = b_ref[pl.ds(i, 1), :op]                       # 1-row f32 bias load
            # bf16 x bf16 -> f32 accumulation on the MXU.
            h = jnp.dot(h.astype(jnp.bfloat16), w_refs[i][...],
                        preferred_element_type=jnp.float32) + b
            if 1 <= i <= num_hidden:                          # hidden layers only
                h = jax.nn.sigmoid(h)
            if i < n_linear - 1:
                h = h.astype(carry_dtype)                     # bf16 carry on v6e/v7x
        o_ref[...] = h.astype(o_ref.dtype)

    return kernel


def _make_streaming_kernel(num_hidden, out_first_p, width_p, out_last_p, carry_dtype):
    """Hidden (width x width) weights streamed from HBM with a double buffer."""

    def kernel(x_ref, w_first_ref, w_hid_hbm, w_last_ref, b_ref, o_ref, wbuf, sem):
        # Prefetch hidden layer 0 so the DMA overlaps the first matmul.
        pltpu.make_async_copy(w_hid_hbm.at[0], wbuf.at[0], sem.at[0]).start()

        h = jnp.dot(x_ref[...].astype(jnp.bfloat16), w_first_ref[...],
                    preferred_element_type=jnp.float32)
        h = (h + b_ref[pl.ds(0, 1), :out_first_p]).astype(carry_dtype)

        for i in range(num_hidden):                           # static unrolled loop
            slot = i & 1
            pltpu.make_async_copy(w_hid_hbm.at[i], wbuf.at[slot], sem.at[slot]).wait()
            if i + 1 < num_hidden:
                pltpu.make_async_copy(w_hid_hbm.at[i + 1], wbuf.at[1 - slot],
                                      sem.at[1 - slot]).start()
            h = jnp.dot(h.astype(jnp.bfloat16), wbuf[slot],
                        preferred_element_type=jnp.float32)
            h = jax.nn.sigmoid(h + b_ref[pl.ds(i + 1, 1), :width_p]).astype(carry_dtype)

        out = jnp.dot(h.astype(jnp.bfloat16), w_last_ref[...],
                      preferred_element_type=jnp.float32)
        out = out + b_ref[pl.ds(num_hidden + 1, 1), :out_last_p]
        o_ref[...] = out.astype(o_ref.dtype)

    return kernel


# ---------------------------------------------------------------------------
# Wrapper
# ---------------------------------------------------------------------------
def _pick_batch_tile(batch, block_batch):
    if batch <= 256:
        return _round_up(batch, _SUBLANE)       # single grid step (small batch)
    # >= 2 grid steps so both v7x TensorCores get work; rows a multiple of 256
    # keeps activation DMAs near the HBM roofline.
    half = _round_up((batch + 1) // 2, 256)
    return max(256, min(block_batch, half))


def _vmem_limit(needed_bytes):
    limit = int(needed_bytes * 1.3) + (2 << 20)
    return min(64 << 20, max(32 << 20, limit))


def mlp_forward(x, params, *, dim_out, block_batch=512, carry_dtype=None):
    """x: (batch, dim_in). params from prepare_params. Returns (batch, dim_out)."""
    if carry_dtype is None:
        carry_dtype = _default_carry_dtype()

    batch, dim_in = x.shape
    b_packed = params["b"]
    n_linear = b_packed.shape[0]
    num_hidden = n_linear - 2
    stream = "w_hidden" in params

    if stream:
        w_first, w_hidden, w_last = params["w_first"], params["w_hidden"], params["w_last"]
        assert w_hidden.shape[0] == num_hidden
        din_p = w_first.shape[0]
        out_first_p = w_first.shape[1]
        width_p = w_hidden.shape[2]
        dout_p = w_last.shape[1]
        out_p = [out_first_p] + [width_p] * num_hidden + [dout_p]
    else:
        w_all = params["w"]
        assert len(w_all) == n_linear
        din_p = w_all[0].shape[0]
        dout_p = w_all[-1].shape[1]
        out_p = [w.shape[1] for w in w_all]

    assert dim_in <= din_p and dim_out <= dout_p

    tb = _pick_batch_tile(batch, block_batch)
    batch_p = _round_up(batch, tb)

    # Pad x only when actually needed (avoid an extra HBM pass otherwise).
    if batch_p == batch and din_p == dim_in:
        x_p = x
    else:
        x_p = jnp.zeros((batch_p, din_p), dtype=x.dtype)
        x_p = x_p.at[:batch, :dim_in].set(x)

    grid = (batch_p // tb,)
    x_spec = pl.BlockSpec((tb, din_p), lambda i: (i, 0))
    out_spec = pl.BlockSpec((tb, dout_p), lambda i: (i, 0))
    # Grid-invariant operands: constant index_map + single buffering.
    invariant = functools.partial(pl.BlockSpec, index_map=lambda i: (0, 0),
                                  pipeline_mode=pl.Buffered(1))

    itemsize = x.dtype.itemsize
    tile_bytes = 2 * tb * din_p * itemsize + 2 * tb * dout_p * itemsize
    h_bytes = 3 * tb * max(out_p) * 4          # f32 dot result + carry + slack
    b_bytes = int(b_packed.size) * 4

    if not stream:
        kernel = _make_resident_kernel(num_hidden, out_p, carry_dtype)
        in_specs = [x_spec] + [invariant(w.shape) for w in w_all] \
            + [invariant(b_packed.shape)]
        operands = (x_p, *w_all, b_packed)
        scratch_shapes = ()
        w_bytes = sum(int(w.size) * 2 for w in w_all)
    else:
        kernel = _make_streaming_kernel(num_hidden, out_first_p, width_p, dout_p,
                                        carry_dtype)
        in_specs = [
            x_spec,
            invariant(w_first.shape),
            pl.BlockSpec(memory_space=pl.ANY),     # hidden weights stay in HBM
            invariant(w_last.shape),
            invariant(b_packed.shape),
        ]
        operands = (x_p, w_first, w_hidden, w_last, b_packed)
        scratch_shapes = (
            pltpu.VMEM((2, width_p, width_p), jnp.bfloat16),   # weight double buffer
            pltpu.SemaphoreType.DMA((2,)),
        )
        w_bytes = (int(w_first.size) + int(w_last.size)) * 2 \
            + 2 * width_p * width_p * 2

    needed = w_bytes + b_bytes + tile_bytes + h_bytes

    out_padded = pl.pallas_call(
        kernel,
        out_shape=jax.ShapeDtypeStruct((batch_p, dout_p), x.dtype),
        grid=grid,
        in_specs=in_specs,
        out_specs=out_spec,
        scratch_shapes=scratch_shapes,
        compiler_params=pltpu.CompilerParams(
            dimension_semantics=("parallel",),
            vmem_limit_bytes=_vmem_limit(needed),
        ),
    )(*operands)

    if batch_p == batch and dout_p == dim_out:
        return out_padded
    return out_padded[:batch, :dim_out]


# ---------------------------------------------------------------------------
# Init / reference (match the PyTorch module: initw=True -> xavier_normal_)
# ---------------------------------------------------------------------------
def init_network_params(key, dim_in, dim_out, layers, width):
    """Xavier-normal weights (initw=True) + PyTorch-default uniform biases."""
    dims = [(dim_in, width)] + [(width, width)] * layers + [(width, dim_out)]
    weights, biases = [], []
    for fan_in, fan_out in dims:
        key, wk, bk = jax.random.split(key, 3)
        std = (2.0 / (fan_in + fan_out)) ** 0.5
        w = std * jax.random.normal(wk, (fan_in, fan_out), dtype=jnp.float32)
        bound = 1.0 / (fan_in ** 0.5)
        b = jax.random.uniform(bk, (fan_out,), minval=-bound, maxval=bound,
                               dtype=jnp.float32)
        weights.append(w)
        biases.append(b)
    return weights, biases


def reference_forward(x, weights, biases, num_hidden_layers,
                      match_kernel_precision=False):
    h = x.astype(jnp.float32)
    for i, (w, b) in enumerate(zip(weights, biases)):
        if match_kernel_precision:
            h = jnp.dot(h.astype(jnp.bfloat16), w.astype(jnp.bfloat16),
                        preferred_element_type=jnp.float32) + b
        else:
            h = h @ w + b
        if 1 <= i <= num_hidden_layers:
            h = jax.nn.sigmoid(h)
    return h


if __name__ == "__main__":
    # ---- Test 1: toy module shapes (VMEM-resident weight path). ------------
    dim_in, dim_out, layers, width = 16, 8, 2, 32
    batch = 8

    key = jax.random.PRNGKey(0)
    key, xk = jax.random.split(key)
    x = jax.random.normal(xk, (batch, dim_in), dtype=jnp.float32)
    weights, biases = init_network_params(key, dim_in, dim_out, layers, width)

    params = prepare_params(weights, biases)          # one-time pad/cast/pack
    assert "w" in params                              # resident path selected
    fwd = jax.jit(functools.partial(mlp_forward, dim_out=dim_out))
    out = jax.block_until_ready(fwd(x, params))

    ref_matched = reference_forward(x, weights, biases, layers,
                                    match_kernel_precision=True)
    ref_f32 = reference_forward(x, weights, biases, layers,
                                match_kernel_precision=False)

    assert out.shape == (batch, dim_out)
    assert jnp.allclose(out, ref_matched, atol=1e-4, rtol=1e-4), \
        "mismatch vs bf16-matched reference"
    assert jnp.allclose(out, ref_f32, atol=5e-2, rtol=5e-2), \
        "mismatch vs f32 reference"

    # ---- Test 2: forced weight-streaming path, ragged batch, 2-step grid. --
    dim_in2, dim_out2, layers2, width2 = 64, 16, 3, 256
    batch2 = 520                                       # ragged -> exercises padding

    key, xk2, pk2 = jax.random.split(key, 3)
    x2 = jax.random.normal(xk2, (batch2, dim_in2), dtype=jnp.float32)
    weights2, biases2 = init_network_params(pk2, dim_in2, dim_out2, layers2, width2)

    params2 = prepare_params(weights2, biases2, stream=True)   # force streaming
    assert "w_hidden" in params2
    fwd2 = jax.jit(functools.partial(mlp_forward, dim_out=dim_out2))
    out2 = jax.block_until_ready(fwd2(x2, params2))

    ref2 = reference_forward(x2, weights2, biases2, layers2,
                             match_kernel_precision=True)
    assert out2.shape == (batch2, dim_out2)
    assert jnp.allclose(out2, ref2, atol=2e-3, rtol=2e-3), \
        "streaming path mismatch vs bf16-matched reference"

    print("KERNEL_OK")
</pallas_src>

<mosaic_0001>
module attributes {stable_mosaic.version = 11 : i64} {
  func.func @kernel(%arg0: i32, %arg1: memref<8x128xf32, #tpu.memory_space<vmem>>, %arg2: memref<128x128xbf16, #tpu.memory_space<vmem>>, %arg3: memref<128x128xbf16, #tpu.memory_space<vmem>>, %arg4: memref<128x128xbf16, #tpu.memory_space<vmem>>, %arg5: memref<128x128xbf16, #tpu.memory_space<vmem>>, %arg6: memref<4x128xf32, #tpu.memory_space<vmem>>, %arg7: memref<8x128xf32, #tpu.memory_space<vmem>>) attributes {dimension_semantics = [#tpu.dimension_semantics<parallel>], iteration_bounds = array<i64: 1>, scalar_prefetch = 0 : i64, scratch_operands = 0 : i64, tpu.core_type = #tpu.core_type<tc>, window_params = [{transform_indices = @transform_0, window_bounds = array<i64: 8, 128>}, {pipeline_mode = #tpu.pipeline_mode<synchronous>, transform_indices = @transform_1, window_bounds = array<i64: 128, 128>}, {pipeline_mode = #tpu.pipeline_mode<synchronous>, transform_indices = @transform_2, window_bounds = array<i64: 128, 128>}, {pipeline_mode = #tpu.pipeline_mode<synchronous>, transform_indices = @transform_3, window_bounds = array<i64: 128, 128>}, {pipeline_mode = #tpu.pipeline_mode<synchronous>, transform_indices = @transform_4, window_bounds = array<i64: 128, 128>}, {pipeline_mode = #tpu.pipeline_mode<synchronous>, transform_indices = @transform_5, window_bounds = array<i64: 4, 128>}, {transform_indices = @transform_6, window_bounds = array<i64: 8, 128>}]} {
    %c0 = arith.constant 0 : index
    %c0_0 = arith.constant 0 : index
    %0 = vector.load %arg1[%c0, %c0_0] : memref<8x128xf32, #tpu.memory_space<vmem>>, vector<8x128xf32>
    %c0_1 = arith.constant 0 : index
    %c0_2 = arith.constant 0 : index
    %1 = vector.load %arg6[%c0_1, %c0_2] : memref<4x128xf32, #tpu.memory_space<vmem>>, vector<1x128xf32>
    %2 = arith.truncf %0 : vector<8x128xf32> to vector<8x128xbf16>
    %c0_3 = arith.constant 0 : index
    %c0_4 = arith.constant 0 : index
    %3 = vector.load %arg2[%c0_3, %c0_4] : memref<128x128xbf16, #tpu.memory_space<vmem>>, vector<128x128xbf16>
    %cst = arith.constant dense<0.000000e+00> : vector<8x128xf32>
    %4 = tpu.matmul %2, %3, %cst {dimension_numbers = #tpu.dot_dimension_numbers<[1], [0], [0], [1], [0, 0, 1, 1], [], []>} : vector<8x128xbf16>, vector<128x128xbf16>, vector<8x128xf32> -> vector<8x128xf32>
    %5 = vector.broadcast %1 : vector<1x128xf32> to vector<8x128xf32>
    %6 = arith.addf %4, %5 : vector<8x128xf32>
    %7 = arith.truncf %6 : vector<8x128xf32> to vector<8x128xbf16>
    %c1 = arith.constant 1 : index
    %c0_5 = arith.constant 0 : index
    %8 = vector.load %arg6[%c1, %c0_5] : memref<4x128xf32, #tpu.memory_space<vmem>>, vector<1x128xf32>
    %c0_6 = arith.constant 0 : index
    %c0_7 = arith.constant 0 : index
    %9 = vector.load %arg3[%c0_6, %c0_7] : memref<128x128xbf16, #tpu.memory_space<vmem>>, vector<128x128xbf16>
    %cst_8 = arith.constant dense<0.000000e+00> : vector<8x128xf32>
    %10 = tpu.matmul %7, %9, %cst_8 {dimension_numbers = #tpu.dot_dimension_numbers<[1], [0], [0], [1], [0, 0, 1, 1], [], []>} : vector<8x128xbf16>, vector<128x128xbf16>, vector<8x128xf32> -> vector<8x128xf32>
    %11 = vector.broadcast %8 : vector<1x128xf32> to vector<8x128xf32>
    %12 = arith.addf %10, %11 : vector<8x128xf32>
    %13 = arith.negf %12 : vector<8x128xf32>
    %14 = math.exp %13 : vector<8x128xf32>
    %cst_9 = arith.constant 1.000000e+00 : f32
    %15 = vector.broadcast %cst_9 : f32 to vector<8x128xf32>
    %16 = arith.addf %15, %14 : vector<8x128xf32>
    %17 = arith.divf %15, %16 : vector<8x128xf32>
    %18 = arith.truncf %17 : vector<8x128xf32> to vector<8x128xbf16>
    %c2 = arith.constant 2 : index
    %c0_10 = arith.constant 0 : index
    %19 = vector.load %arg6[%c2, %c0_10] : memref<4x128xf32, #tpu.memory_space<vmem>>, vector<1x128xf32>
    %c0_11 = arith.constant 0 : index
    %c0_12 = arith.constant 0 : index
    %20 = vector.load %arg4[%c0_11, %c0_12] : memref<128x128xbf16, #tpu.memory_space<vmem>>, vector<128x128xbf16>
    %cst_13 = arith.constant dense<0.000000e+00> : vector<8x128xf32>
    %21 = tpu.matmul %18, %20, %cst_13 {dimension_numbers = #tpu.dot_dimension_numbers<[1], [0], [0], [1], [0, 0, 1, 1], [], []>} : vector<8x128xbf16>, vector<128x128xbf16>, vector<8x128xf32> -> vector<8x128xf32>
    %22 = vector.broadcast %19 : vector<1x128xf32> to vector<8x128xf32>
    %23 = arith.addf %21, %22 : vector<8x128xf32>
    %24 = arith.negf %23 : vector<8x128xf32>
    %25 = math.exp %24 : vector<8x128xf32>
    %cst_14 = arith.constant 1.000000e+00 : f32
    %26 = vector.broadcast %cst_14 : f32 to vector<8x128xf32>
    %27 = arith.addf %26, %25 : vector<8x128xf32>
    %28 = arith.divf %26, %27 : vector<8x128xf32>
    %29 = arith.truncf %28 : vector<8x128xf32> to vector<8x128xbf16>
    %c3 = arith.constant 3 : index
    %c0_15 = arith.constant 0 : index
    %30 = vector.load %arg6[%c3, %c0_15] : memref<4x128xf32, #tpu.memory_space<vmem>>, vector<1x128xf32>
    %c0_16 = arith.constant 0 : index
    %c0_17 = arith.constant 0 : index
    %31 = vector.load %arg5[%c0_16, %c0_17] : memref<128x128xbf16, #tpu.memory_space<vmem>>, vector<128x128xbf16>
    %cst_18 = arith.constant dense<0.000000e+00> : vector<8x128xf32>
    %32 = tpu.matmul %29, %31, %cst_18 {dimension_numbers = #tpu.dot_dimension_numbers<[1], [0], [0], [1], [0, 0, 1, 1], [], []>} : vector<8x128xbf16>, vector<128x128xbf16>, vector<8x128xf32> -> vector<8x128xf32>
    %33 = vector.broadcast %30 : vector<1x128xf32> to vector<8x128xf32>
    %34 = arith.addf %32, %33 : vector<8x128xf32>
    %c0_19 = arith.constant 0 : index
    %c0_20 = arith.constant 0 : index
    %35 = vector.load %arg7[%c0_19, %c0_20] : memref<8x128xf32, #tpu.memory_space<vmem>>, vector<8x128xf32>
    tpu.vector_store %arg7[%c0_19, %c0_20], %34 {strides = array<i32>} : memref<8x128xf32, #tpu.memory_space<vmem>>, vector<8x128xf32>,
    return
  }
  func.func @transform_0(%arg0: i32) -> (i32, i32) {
    %c0_i32 = arith.constant 0 : i32
    %c0_i32_0 = arith.constant 0 : i32
    return %arg0, %c0_i32 : i32, i32
  }
  func.func @transform_1(%arg0: i32) -> (i32, i32) {
    %c0_i32 = arith.constant 0 : i32
    %c0_i32_0 = arith.constant 0 : i32
    %c0_i32_1 = arith.constant 0 : i32
    return %c0_i32, %c0_i32_0 : i32, i32
  }
  func.func @transform_2(%arg0: i32) -> (i32, i32) {
    %c0_i32 = arith.constant 0 : i32
    %c0_i32_0 = arith.constant 0 : i32
    %c0_i32_1 = arith.constant 0 : i32
    return %c0_i32, %c0_i32_0 : i32, i32
  }
  func.func @transform_3(%arg0: i32) -> (i32, i32) {
    %c0_i32 = arith.constant 0 : i32
    %c0_i32_0 = arith.constant 0 : i32
    %c0_i32_1 = arith.constant 0 : i32
    return %c0_i32, %c0_i32_0 : i32, i32
  }
  func.func @transform_4(%arg0: i32) -> (i32, i32) {
    %c0_i32 = arith.constant 0 : i32
    %c0_i32_0 = arith.constant 0 : i32
    %c0_i32_1 = arith.constant 0 : i32
    return %c0_i32, %c0_i32_0 : i32, i32
  }
  func.func @transform_5(%arg0: i32) -> (i32, i32) {
    %c0_i32 = arith.constant 0 : i32
    %c0_i32_0 = arith.constant 0 : i32
    %c0_i32_1 = arith.constant 0 : i32
    return %c0_i32, %c0_i32_0 : i32, i32
  }
  func.func @transform_6(%arg0: i32) -> (i32, i32) {
    %c0_i32 = arith.constant 0 : i32
    %c0_i32_0 = arith.constant 0 : i32
    return %arg0, %c0_i32 : i32, i32
  }
}

</mosaic_0001>

<llo_original>
// kernel: mlp_forward.1
$region0: #{mlp_forward.1}
  #allocation0 [shape = 'u32[]', space=smem, size = 0x4, offset = 0x4, fixed_abs, tag = 'smem constant byte address 0x4 - core index']
  #allocation1 [shape = 'u32[144,128]{1,0:T(1,128)}', space=vmem, size = 0x12000, scoped, tag = 'internal scratch']
  %s0 = inlined_call_operand.vmem [shape: f32[8,128], index: 0, kind: input, shape index: {}]
  %s1 = inlined_call_operand.hbm [shape: bf16[128,128], index: 1, kind: input, shape index: {}]
  %s2 = inlined_call_operand.hbm [shape: bf16[128,128], index: 2, kind: input, shape index: {}]
  %s3 = inlined_call_operand.hbm [shape: bf16[128,128], index: 3, kind: input, shape index: {}]
  %s4 = inlined_call_operand.hbm [shape: bf16[128,128], index: 4, kind: input, shape index: {}]
  %s5 = inlined_call_operand.vmem [shape: f32[4,128], index: 5, kind: input, shape index: {}]
  %s6 = inlined_call_operand.hbm [shape: f32[8,128], index: 6, kind: output, shape index: {}]
  %s7 = sld [smem:[#allocation0]]
  $region50: #{mlp_forward.1} parent=0
    _
  %s9 = ssub.s32 1, %s7
  %s10 = scalar_select 0, %s9, %s7
  $region1: #{mlp_forward.1} parent=0
    #allocation2 [shape = 'u8[32768]{0}', space=vmem, size = 0x8000, scoped, tag = 'input window, operand 1, single buffered']
    #allocation3 [shape = 's32[1]{0}', space=sflag, size = 0x4, scoped, tag = 'scoped memory for mlp_forward.1']
    #allocation4 [shape = 's32[1]{0}', space=sflag, size = 0x4, scoped, tag = 'scoped memory for mlp_forward.1']
    #allocation5 [shape = 'u8[32768]{0}', space=vmem, size = 0x8000, scoped, tag = 'input window, operand 2, single buffered']
    #allocation6 [shape = 's32[1]{0}', space=sflag, size = 0x4, scoped, tag = 'scoped memory for mlp_forward.1']
    #allocation7 [shape = 'u8[32768]{0}', space=vmem, size = 0x8000, scoped, tag = 'input window, operand 3, single buffered']
    #allocation8 [shape = 'u8[32768]{0}', space=vmem, size = 0x8000, scoped, tag = 'input window, operand 4, single buffered']
    #allocation9 [shape = 's32[1]{0}', space=sflag, size = 0x4, scoped, tag = 'scoped memory for mlp_forward.1']
    #allocation10 [shape = 'u8[4096]{0}', space=vmem, size = 0x1000, scoped, tag = 'output window, operand 0, single buffered']
    %11 = vsyncpa [#allocation3], 0
    %12 = vsyncpa [#allocation6], 0
    %13 = vsyncpa [#allocation9], 0
    %14 = vsyncpa [#allocation4], 0
    // Predicated region
    $region2: #{mlp_forward.1} parent=1 // pred_check
      _
    $region3: #{mlp_forward.1} parent=1 // pred_check_branch
      %16 = sbr.rel (0) target = $region5
    $region4: #{mlp_forward.1} parent=1 // pred_region
      _
    $region5: #{mlp_forward.1} parent=1 // pred_fallthru
      _
    // Predicated region
    $region6: #{mlp_forward.1} parent=1 // pred_check
      _
    $region7: #{mlp_forward.1} parent=1 // pred_check_branch
      %18 = sbr.rel (0) target = $region9
    $region8: #{mlp_forward.1} parent=1 // pred_region
      %s20 = ssub.s32 1024, 1024
      %21 = vsyncadd [#allocation3], %s20
      %s22 = sshll.u32 [#allocation2], 4
      %s23 = int_to_ptr.vmem [resolvable:$true] %s22
      %28 = dma.hbm_to_vmem [thread:$0]  %s1, 1024, %s23, [#allocation3], 64, 64, 4
    $region9: #{mlp_forward.1} parent=1 // pred_fallthru
      _
    // Predicated region
    $region10: #{mlp_forward.1} parent=1 // pred_check
      _
    $region11: #{mlp_forward.1} parent=1 // pred_check_branch
      %30 = sbr.rel (0) target = $region13
    $region12: #{mlp_forward.1} parent=1 // pred_region
      %s32 = ssub.s32 1024, 1024
      %33 = vsyncadd [#allocation6], %s32
      %s34 = sshll.u32 [#allocation5], 4
      %s35 = int_to_ptr.vmem [resolvable:$true] %s34
      %40 = dma.hbm_to_vmem [thread:$0]  %s2, 1024, %s35, [#allocation6], 64, 64, 4
    $region13: #{mlp_forward.1} parent=1 // pred_fallthru
      _
    // Predicated region
    $region14: #{mlp_forward.1} parent=1 // pred_check
      _
    $region15: #{mlp_forward.1} parent=1 // pred_check_branch
      %42 = sbr.rel (0) target = $region17
    $region16: #{mlp_forward.1} parent=1 // pred_region
      %s44 = ssub.s32 1024, 1024
      %45 = vsyncadd [#allocation6], %s44
      %s46 = sshll.u32 [#allocation7], 4
      %s47 = int_to_ptr.vmem [resolvable:$true] %s46
      %52 = dma.hbm_to_vmem [thread:$0]  %s3, 1024, %s47, [#allocation6], 64, 64, 4
    $region17: #{mlp_forward.1} parent=1 // pred_fallthru
      _
    // Predicated region
    $region18: #{mlp_forward.1} parent=1 // pred_check
      _
    $region19: #{mlp_forward.1} parent=1 // pred_check_branch
      %54 = sbr.rel (0) target = $region21
    $region20: #{mlp_forward.1} parent=1 // pred_region
      %s56 = ssub.s32 1024, 1024
      %57 = vsyncadd [#allocation9], %s56
      %s58 = sshll.u32 [#allocation8], 4
      %s59 = int_to_ptr.vmem [resolvable:$true] %s58
      %64 = dma.hbm_to_vmem [thread:$0]  %s4, 1024, %s59, [#allocation9], 64, 64, 4
    $region21: #{mlp_forward.1} parent=1 // pred_fallthru
      _
    // Predicated region
    $region22: #{mlp_forward.1} parent=1 // pred_check
      _
    $region23: #{mlp_forward.1} parent=1 // pred_check_branch
      %66 = sbr.rel (0) target = $region25
    $region24: #{mlp_forward.1} parent=1 // pred_region
      _
    $region25: #{mlp_forward.1} parent=1 // pred_fallthru
      _
    // Predicated region
    $region26: #{mlp_forward.1} parent=1 // pred_check
      _
    $region27: #{mlp_forward.1} parent=1 // pred_check_branch
      %68 = sbr.rel (0) target = $region29
    $region28: #{mlp_forward.1} parent=1 // pred_region
      %69 = dma.done [#allocation3], 1024
    $region29: #{mlp_forward.1} parent=1 // pred_fallthru
      _
    // Predicated region
    $region30: #{mlp_forward.1} parent=1 // pred_check
      _
    $region31: #{mlp_forward.1} parent=1 // pred_check_branch
      %71 = sbr.rel (0) target = $region33
    $region32: #{mlp_forward.1} parent=1 // pred_region
      %72 = dma.done [#allocation6], 1024
    $region33: #{mlp_forward.1} parent=1 // pred_fallthru
      _
    // Predicated region
    $region34: #{mlp_forward.1} parent=1 // pred_check
      _
    $region35: #{mlp_forward.1} parent=1 // pred_check_branch
      %74 = sbr.rel (0) target = $region37
    $region36: #{mlp_forward.1} parent=1 // pred_region
      %75 = dma.done [#allocation6], 1024
    $region37: #{mlp_forward.1} parent=1 // pred_fallthru
      _
    // Predicated region
    $region38: #{mlp_forward.1} parent=1 // pred_check
      _
    $region39: #{mlp_forward.1} parent=1 // pred_check_branch
      %77 = sbr.rel (0) target = $region41
    $region40: #{mlp_forward.1} parent=1 // pred_region
      %78 = dma.done [#allocation9], 1024
    $region41: #{mlp_forward.1} parent=1 // pred_fallthru
      _
    %v80 = vld [vmem:[%s0] sm:$0xff]
    %v81 = vld [vmem:[%s5] sm:$0x1]
    %v82 = vpack.c.bf16 %v80, %v80
    %v83 = vld [vmem:[#allocation2] sm:$0xf]
    %v84 = vld [vmem:[#allocation2 + $0x4] sm:$0xf]
    %v85 = vld [vmem:[#allocation2 + $0x8] sm:$0xf]
    %v86 = vld [vmem:[#allocation2 + $0xc] sm:$0xf]
    %v87 = vld [vmem:[#allocation2 + $0x10] sm:$0xf]
    %v88 = vld [vmem:[#allocation2 + $0x14] sm:$0xf]
    %v89 = vld [vmem:[#allocation2 + $0x18] sm:$0xf]
    %v90 = vld [vmem:[#allocation2 + $0x1c] sm:$0xf]
    %v91 = vld [vmem:[#allocation2 + $0x20] sm:$0xf]
    %v92 = vld [vmem:[#allocation2 + $0x24] sm:$0xf]
    %v93 = vld [vmem:[#allocation2 + $0x28] sm:$0xf]
    %v94 = vld [vmem:[#allocation2 + $0x2c] sm:$0xf]
    %v95 = vld [vmem:[#allocation2 + $0x30] sm:$0xf]
    %v96 = vld [vmem:[#allocation2 + $0x34] sm:$0xf]
    %v97 = vld [vmem:[#allocation2 + $0x38] sm:$0xf]
    %v98 = vld [vmem:[#allocation2 + $0x3c] sm:$0xf]
    %v99 = vlaneseq
    %v100 = vshrl.u32 %v99, 7
    %v101 = vsub.s32 0, %v100
    %v102 = vrot.slane %v81, %v101
    %v119 = vunpack.c.l.b16 %v83
    %v120 = vunpack.c.l.b16 %v84
    %v121 = vunpack.c.l.b16 %v85
    %v122 = vunpack.c.l.b16 %v86
    %v123 = vunpack.c.l.b16 %v87
    %v124 = vunpack.c.l.b16 %v88
    %v125 = vunpack.c.l.b16 %v89
    %v126 = vunpack.c.l.b16 %v90
    %v127 = vunpack.c.l.b16 %v91
    %v128 = vunpack.c.l.b16 %v92
    %v129 = vunpack.c.l.b16 %v93
    %v130 = vunpack.c.l.b16 %v94
    %v131 = vunpack.c.l.b16 %v95
    %v132 = vunpack.c.l.b16 %v96
    %v133 = vunpack.c.l.b16 %v97
    %v134 = vunpack.c.l.b16 %v98
    %v135 = vpack.c.b16 %v120, %v119
    %v136 = vpack.c.b16 %v122, %v121
    %v137 = vpack.c.b16 %v124, %v123
    %v138 = vpack.c.b16 %v126, %v125
    %v139 = vpack.c.b16 %v128, %v127
    %v140 = vpack.c.b16 %v130, %v129
    %v141 = vpack.c.b16 %v132, %v131
    %v142 = vpack.c.b16 %v134, %v133
    %151 = vmatprep.subr.bf16.mxu0 0
    %152 = vmatpush1.bf16.msra.mxu0 %v142
    %153 = vmatprep.subr.bf16.mxu0 0
    %154 = vmatpush1.bf16.msra.mxu0 %v141
    %155 = vmatprep.subr.bf16.mxu0 0
    %156 = vmatpush1.bf16.msra.mxu0 %v140
    %157 = vmatprep.subr.bf16.mxu0 0
    %158 = vmatpush1.bf16.msra.mxu0 %v139
    %159 = vmatprep.subr.bf16.mxu0 0
    %160 = vmatpush1.bf16.msra.mxu0 %v138
    %161 = vmatprep.subr.bf16.mxu0 0
    %162 = vmatpush1.bf16.msra.mxu0 %v137
    %163 = vmatprep.subr.bf16.mxu0 0
    %164 = vmatpush1.bf16.msra.mxu0 %v136
    %165 = vmatprep.subr.bf16.mxu0 0
    %166 = vmatpush1.bf16.msra.mxu0 %v135
    %167 = vmatprep.subr.bf16.mxu0 0
    %168 = vmatpush2.bf16.msra.mxu0 0
    %169 = vmatprep.subr.bf16.mxu0 0
    %170 = vmatpush2.bf16.msra.mxu0 0
    %171 = vmatprep.subr.bf16.mxu0 0
    %172 = vmatpush2.bf16.msra.mxu0 0
    %173 = vmatprep.subr.bf16.mxu0 0
    %174 = vmatpush2.bf16.msra.mxu0 0
    %175 = vmatprep.subr.bf16.mxu0 0
    %176 = vmatpush2.bf16.msra.mxu0 0
    %177 = vmatprep.subr.bf16.mxu0 0
    %178 = vmatpush2.bf16.msra.mxu0 0
    %179 = vmatprep.subr.bf16.mxu0 0
    %180 = vmatpush2.bf16.msra.mxu0 0
    %181 = vmatprep.subr.bf16.mxu0 0
    %182 = vmatpush2.bf16.msra.mxu0 0
    %183 = vmatprep.mubr.bf16.mxu0 0
    %184 = vmatmul.mubr.bf16.gmra.mxu0 %v82
    %v185 = vpop.f32.mrf.mxu0
    %v186 = vadd.f32 %v102, %v185
    %v187 = vpop.f32.mrf.mxu0
    %v188 = vpop.f32.mrf.mxu0
    %v189 = vpop.f32.mrf.mxu0
    %190 = vdwg.mxu0
    %v191 = vpack.c.bf16 %v186, %v186
    %v192 = vld [vmem:[%s5 + $0x1] sm:$0x1]
    %v193 = vld [vmem:[#allocation5] sm:$0xf]
    %v194 = vld [vmem:[#allocation5 + $0x4] sm:$0xf]
    %v195 = vld [vmem:[#allocation5 + $0x8] sm:$0xf]
    %v196 = vld [vmem:[#allocation5 + $0xc] sm:$0xf]
    %v197 = vld [vmem:[#allocation5 + $0x10] sm:$0xf]
    %v198 = vld [vmem:[#allocation5 + $0x14] sm:$0xf]
    %v199 = vld [vmem:[#allocation5 + $0x18] sm:$0xf]
    %v200 = vld [vmem:[#allocation5 + $0x1c] sm:$0xf]
    %v201 = vld [vmem:[#allocation5 + $0x20] sm:$0xf]
    %v202 = vld [vmem:[#allocation5 + $0x24] sm:$0xf]
    %v203 = vld [vmem:[#allocation5 + $0x28] sm:$0xf]
    %v204 = vld [vmem:[#allocation5 + $0x2c] sm:$0xf]
    %v205 = vld [vmem:[#allocation5 + $0x30] sm:$0xf]
    %v206 = vld [vmem:[#allocation5 + $0x34] sm:$0xf]
    %v207 = vld [vmem:[#allocation5 + $0x38] sm:$0xf]
    %v208 = vld [vmem:[#allocation5 + $0x3c] sm:$0xf]
    %v209 = vlaneseq
    %v210 = vshrl.u32 %v209, 7
    %v211 = vsub.s32 0, %v210
    %v212 = vrot.slane %v192, %v211
    %v229 = vunpack.c.l.b16 %v193
    %v230 = vunpack.c.l.b16 %v194
    %v231 = vunpack.c.l.b16 %v195
    %v232 = vunpack.c.l.b16 %v196
    %v233 = vunpack.c.l.b16 %v197
    %v234 = vunpack.c.l.b16 %v198
    %v235 = vunpack.c.l.b16 %v199
    %v236 = vunpack.c.l.b16 %v200
    %v237 = vunpack.c.l.b16 %v201
    %v238 = vunpack.c.l.b16 %v202
    %v239 = vunpack.c.l.b16 %v203
    %v240 = vunpack.c.l.b16 %v204
    %v241 = vunpack.c.l.b16 %v205
    %v242 = vunpack.c.l.b16 %v206
    %v243 = vunpack.c.l.b16 %v207
    %v244 = vunpack.c.l.b16 %v208
    %v245 = vpack.c.b16 %v230, %v229
    %v246 = vpack.c.b16 %v232, %v231
    %v247 = vpack.c.b16 %v234, %v233
    %v248 = vpack.c.b16 %v236, %v235
    %v249 = vpack.c.b16 %v238, %v237
    %v250 = vpack.c.b16 %v240, %v239
    %v251 = vpack.c.b16 %v242, %v241
    %v252 = vpack.c.b16 %v244, %v243
    %261 = vmatprep.subr.bf16.mxu0 0
    %262 = vmatpush1.bf16.msra.mxu0 %v252
    %263 = vmatprep.subr.bf16.mxu0 0
    %264 = vmatpush1.bf16.msra.mxu0 %v251
    %265 = vmatprep.subr.bf16.mxu0 0
    %266 = vmatpush1.bf16.msra.mxu0 %v250
    %267 = vmatprep.subr.bf16.mxu0 0
    %268 = vmatpush1.bf16.msra.mxu0 %v249
    %269 = vmatprep.subr.bf16.mxu0 0
    %270 = vmatpush1.bf16.msra.mxu0 %v248
    %271 = vmatprep.subr.bf16.mxu0 0
    %272 = vmatpush1.bf16.msra.mxu0 %v247
    %273 = vmatprep.subr.bf16.mxu0 0
    %274 = vmatpush1.bf16.msra.mxu0 %v246
    %275 = vmatprep.subr.bf16.mxu0 0
    %276 = vmatpush1.bf16.msra.mxu0 %v245
    %277 = vmatprep.subr.bf16.mxu0 0
    %278 = vmatpush2.bf16.msra.mxu0 0
    %279 = vmatprep.subr.bf16.mxu0 0
    %280 = vmatpush2.bf16.msra.mxu0 0
    %281 = vmatprep.subr.bf16.mxu0 0
    %282 = vmatpush2.bf16.msra.mxu0 0
    %283 = vmatprep.subr.bf16.mxu0 0
    %284 = vmatpush2.bf16.msra.mxu0 0
    %285 = vmatprep.subr.bf16.mxu0 0
    %286 = vmatpush2.bf16.msra.mxu0 0
    %287 = vmatprep.subr.bf16.mxu0 0
    %288 = vmatpush2.bf16.msra.mxu0 0
    %289 = vmatprep.subr.bf16.mxu0 0
    %290 = vmatpush2.bf16.msra.mxu0 0
    %291 = vmatprep.subr.bf16.mxu0 0
    %292 = vmatpush2.bf16.msra.mxu0 0
    %293 = vmatprep.mubr.bf16.mxu0 0
    %294 = vmatmul.mubr.bf16.gmra.mxu0 %v191
    %v295 = vpop.f32.mrf.mxu0
    %v296 = vadd.f32 %v212, %v295
    %v297 = vpop.f32.mrf.mxu0
    %v298 = vpop.f32.mrf.mxu0
    %v299 = vpop.f32.mrf.mxu0
    %300 = vdwg.mxu0
    %v301 = vxor.u32 %v296, 2147483648
    %v302 = vmul.f32 %v301, 1.442695
    %v303 = vpow.pop %v302
    %v304 = vadd.f32 %v303, 1.0
    %v305 = vrcp.pop %v304
    %v306 = vmul.f32 1.0, %v305
    %v307 = vpack.c.bf16 %v306, %v306
    %v308 = vld [vmem:[%s5 + $0x2] sm:$0x1]
    %v309 = vld [vmem:[#allocation7] sm:$0xf]
    %v310 = vld [vmem:[#allocation7 + $0x4] sm:$0xf]
    %v311 = vld [vmem:[#allocation7 + $0x8] sm:$0xf]
    %v312 = vld [vmem:[#allocation7 + $0xc] sm:$0xf]
    %v313 = vld [vmem:[#allocation7 + $0x10] sm:$0xf]
    %v314 = vld [vmem:[#allocation7 + $0x14] sm:$0xf]
    %v315 = vld [vmem:[#allocation7 + $0x18] sm:$0xf]
    %v316 = vld [vmem:[#allocation7 + $0x1c] sm:$0xf]
    %v317 = vld [vmem:[#allocation7 + $0x20] sm:$0xf]
    %v318 = vld [vmem:[#allocation7 + $0x24] sm:$0xf]
    %v319 = vld [vmem:[#allocation7 + $0x28] sm:$0xf]
    %v320 = vld [vmem:[#allocation7 + $0x2c] sm:$0xf]
    %v321 = vld [vmem:[#allocation7 + $0x30] sm:$0xf]
    %v322 = vld [vmem:[#allocation7 + $0x34] sm:$0xf]
    %v323 = vld [vmem:[#allocation7 + $0x38] sm:$0xf]
    %v324 = vld [vmem:[#allocation7 + $0x3c] sm:$0xf]
    %v325 = vlaneseq
    %v326 = vshrl.u32 %v325, 7
    %v327 = vsub.s32 0, %v326
    %v328 = vrot.slane %v308, %v327
    %v345 = vunpack.c.l.b16 %v309
    %v346 = vunpack.c.l.b16 %v310
    %v347 = vunpack.c.l.b16 %v311
    %v348 = vunpack.c.l.b16 %v312
    %v349 = vunpack.c.l.b16 %v313
    %v350 = vunpack.c.l.b16 %v314
    %v351 = vunpack.c.l.b16 %v315
    %v352 = vunpack.c.l.b16 %v316
    %v353 = vunpack.c.l.b16 %v317
    %v354 = vunpack.c.l.b16 %v318
    %v355 = vunpack.c.l.b16 %v319
    %v356 = vunpack.c.l.b16 %v320
    %v357 = vunpack.c.l.b16 %v321
    %v358 = vunpack.c.l.b16 %v322
    %v359 = vunpack.c.l.b16 %v323
    %v360 = vunpack.c.l.b16 %v324
    %v361 = vpack.c.b16 %v346, %v345
    %v362 = vpack.c.b16 %v348, %v347
    %v363 = vpack.c.b16 %v350, %v349
    %v364 = vpack.c.b16 %v352, %v351
    %v365 = vpack.c.b16 %v354, %v353
    %v366 = vpack.c.b16 %v356, %v355
    %v367 = vpack.c.b16 %v358, %v357
    %v368 = vpack.c.b16 %v360, %v359
    %377 = vmatprep.subr.bf16.mxu0 0
    %378 = vmatpush1.bf16.msra.mxu0 %v368
    %379 = vmatprep.subr.bf16.mxu0 0
    %380 = vmatpush1.bf16.msra.mxu0 %v367
    %381 = vmatprep.subr.bf16.mxu0 0
    %382 = vmatpush1.bf16.msra.mxu0 %v366
    %383 = vmatprep.subr.bf16.mxu0 0
    %384 = vmatpush1.bf16.msra.mxu0 %v365
    %385 = vmatprep.subr.bf16.mxu0 0
    %386 = vmatpush1.bf16.msra.mxu0 %v364
    %387 = vmatprep.subr.bf16.mxu0 0
    %388 = vmatpush1.bf16.msra.mxu0 %v363
    %389 = vmatprep.subr.bf16.mxu0 0
    %390 = vmatpush1.bf16.msra.mxu0 %v362
    %391 = vmatprep.subr.bf16.mxu0 0
    %392 = vmatpush1.bf16.msra.mxu0 %v361
    %393 = vmatprep.subr.bf16.mxu0 0
    %394 = vmatpush2.bf16.msra.mxu0 0
    %395 = vmatprep.subr.bf16.mxu0 0
    %396 = vmatpush2.bf16.msra.mxu0 0
    %397 = vmatprep.subr.bf16.mxu0 0
    %398 = vmatpush2.bf16.msra.mxu0 0
    %399 = vmatprep.subr.bf16.mxu0 0
    %400 = vmatpush2.bf16.msra.mxu0 0
    %401 = vmatprep.subr.bf16.mxu0 0
    %402 = vmatpush2.bf16.msra.mxu0 0
    %403 = vmatprep.subr.bf16.mxu0 0
    %404 = vmatpush2.bf16.msra.mxu0 0
    %405 = vmatprep.subr.bf16.mxu0 0
    %406 = vmatpush2.bf16.msra.mxu0 0
    %407 = vmatprep.subr.bf16.mxu0 0
    %408 = vmatpush2.bf16.msra.mxu0 0
    %409 = vmatprep.mubr.bf16.mxu0 0
    %410 = vmatmul.mubr.bf16.gmra.mxu0 %v307
    %v411 = vpop.f32.mrf.mxu0
    %v412 = vadd.f32 %v328, %v411
    %v413 = vpop.f32.mrf.mxu0
    %v414 = vpop.f32.mrf.mxu0
    %v415 = vpop.f32.mrf.mxu0
    %416 = vdwg.mxu0
    %v417 = vxor.u32 %v412, 2147483648
    %v418 = vmul.f32 %v417, 1.442695
    %v419 = vpow.pop %v418
    %v420 = vadd.f32 %v419, 1.0
    %v421 = vrcp.pop %v420
    %v422 = vmul.f32 1.0, %v421
    %v423 = vpack.c.bf16 %v422, %v422
    %v424 = vld [vmem:[%s5 + $0x3] sm:$0x1]
    %v425 = vld [vmem:[#allocation8] sm:$0xf]
    %v426 = vld [vmem:[#allocation8 + $0x4] sm:$0xf]
    %v427 = vld [vmem:[#allocation8 + $0x8] sm:$0xf]
    %v428 = vld [vmem:[#allocation8 + $0xc] sm:$0xf]
    %v429 = vld [vmem:[#allocation8 + $0x10] sm:$0xf]
    %v430 = vld [vmem:[#allocation8 + $0x14] sm:$0xf]
    %v431 = vld [vmem:[#allocation8 + $0x18] sm:$0xf]
    %v432 = vld [vmem:[#allocation8 + $0x1c] sm:$0xf]
    %v433 = vld [vmem:[#allocation8 + $0x20] sm:$0xf]
    %v434 = vld [vmem:[#allocation8 + $0x24] sm:$0xf]
    %v435 = vld [vmem:[#allocation8 + $0x28] sm:$0xf]
    %v436 = vld [vmem:[#allocation8 + $0x2c] sm:$0xf]
    %v437 = vld [vmem:[#allocation8 + $0x30] sm:$0xf]
    %v438 = vld [vmem:[#allocation8 + $0x34] sm:$0xf]
    %v439 = vld [vmem:[#allocation8 + $0x38] sm:$0xf]
    %v440 = vld [vmem:[#allocation8 + $0x3c] sm:$0xf]
    %v441 = vlaneseq
    %v442 = vshrl.u32 %v441, 7
    %v443 = vsub.s32 0, %v442
    %v444 = vrot.slane %v424, %v443
    %v461 = vunpack.c.l.b16 %v425
    %v462 = vunpack.c.l.b16 %v426
    %v463 = vunpack.c.l.b16 %v427
    %v464 = vunpack.c.l.b16 %v428
    %v465 = vunpack.c.l.b16 %v429
    %v466 = vunpack.c.l.b16 %v430
    %v467 = vunpack.c.l.b16 %v431
    %v468 = vunpack.c.l.b16 %v432
    %v469 = vunpack.c.l.b16 %v433
    %v470 = vunpack.c.l.b16 %v434
    %v471 = vunpack.c.l.b16 %v435
    %v472 = vunpack.c.l.b16 %v436
    %v473 = vunpack.c.l.b16 %v437
    %v474 = vunpack.c.l.b16 %v438
    %v475 = vunpack.c.l.b16 %v439
    %v476 = vunpack.c.l.b16 %v440
    %v477 = vpack.c.b16 %v462, %v461
    %v478 = vpack.c.b16 %v464, %v463
    %v479 = vpack.c.b16 %v466, %v465
    %v480 = vpack.c.b16 %v468, %v467
    %v481 = vpack.c.b16 %v470, %v469
    %v482 = vpack.c.b16 %v472, %v471
    %v483 = vpack.c.b16 %v474, %v473
    %v484 = vpack.c.b16 %v476, %v475
    %493 = vmatprep.subr.bf16.mxu0 0
    %494 = vmatpush1.bf16.msra.mxu0 %v484
    %495 = vmatprep.subr.bf16.mxu0 0
    %496 = vmatpush1.bf16.msra.mxu0 %v483
    %497 = vmatprep.subr.bf16.mxu0 0
    %498 = vmatpush1.bf16.msra.mxu0 %v482
    %499 = vmatprep.subr.bf16.mxu0 0
    %500 = vmatpush1.bf16.msra.mxu0 %v481
    %501 = vmatprep.subr.bf16.mxu0 0
    %502 = vmatpush1.bf16.msra.mxu0 %v480
    %503 = vmatprep.subr.bf16.mxu0 0
    %504 = vmatpush1.bf16.msra.mxu0 %v479
    %505 = vmatprep.subr.bf16.mxu0 0
    %506 = vmatpush1.bf16.msra.mxu0 %v478
    %507 = vmatprep.subr.bf16.mxu0 0
    %508 = vmatpush1.bf16.msra.mxu0 %v477
    %509 = vmatprep.subr.bf16.mxu0 0
    %510 = vmatpush2.bf16.msra.mxu0 0
    %511 = vmatprep.subr.bf16.mxu0 0
    %512 = vmatpush2.bf16.msra.mxu0 0
    %513 = vmatprep.subr.bf16.mxu0 0
    %514 = vmatpush2.bf16.msra.mxu0 0
    %515 = vmatprep.subr.bf16.mxu0 0
    %516 = vmatpush2.bf16.msra.mxu0 0
    %517 = vmatprep.subr.bf16.mxu0 0
    %518 = vmatpush2.bf16.msra.mxu0 0
    %519 = vmatprep.subr.bf16.mxu0 0
    %520 = vmatpush2.bf16.msra.mxu0 0
    %521 = vmatprep.subr.bf16.mxu0 0
    %522 = vmatpush2.bf16.msra.mxu0 0
    %523 = vmatprep.subr.bf16.mxu0 0
    %524 = vmatpush2.bf16.msra.mxu0 0
    %525 = vmatprep.mubr.bf16.mxu0 0
    %526 = vmatmul.mubr.bf16.gmra.mxu0 %v423
    %v527 = vpop.f32.mrf.mxu0
    %v528 = vadd.f32 %v444, %v527
    %v529 = vpop.f32.mrf.mxu0
    %v530 = vpop.f32.mrf.mxu0
    %v531 = vpop.f32.mrf.mxu0
    %532 = vdwg.mxu0
    %533 = vst [vmem:[#allocation10] sm:$0xff] %v528
    // Predicated region
    $region42: #{mlp_forward.1} parent=1 // pred_check
      _
    $region43: #{mlp_forward.1} parent=1 // pred_check_branch
      %535 = sbr.rel (0) target = $region45
    $region44: #{mlp_forward.1} parent=1 // pred_region
      %s537 = ssub.s32 128, 128
      %538 = vsyncadd [#allocation4], %s537
      %s540 = sshll.u32 [#allocation10], 4
      %s541 = int_to_ptr.vmem [resolvable:$true] %s540
      %543 = dma.vmem_to_hbm [thread:$0]  %s541, 128, %s6, [#allocation4]
    $region45: #{mlp_forward.1} parent=1 // pred_fallthru
      _
    // Predicated region
    $region46: #{mlp_forward.1} parent=1 // pred_check
      _
    $region47: #{mlp_forward.1} parent=1 // pred_check_branch
      %545 = sbr.rel (0) target = $region49
    $region48: #{mlp_forward.1} parent=1 // pred_region
      %546 = dma.done [#allocation4], 128
    $region49: #{mlp_forward.1} parent=1 // pred_fallthru
      _
    %547 = vsyncpa [#allocation3], 1
    %548 = vsyncpa [#allocation6], 1
    %549 = vsyncpa [#allocation9], 1
    %550 = vsyncpa [#allocation4], 1

</llo_original>
